<compile_context>
chip_gen: v7x
topology: tpu7x:2x2x1
jax: 0.10.0
libtpu: 0.0.40
codegen_flags: <defaults>
</compile_context>

<pallas_src>
import functools

import jax
import jax.numpy as jnp
from jax.experimental import pallas as pl
from jax.experimental.pallas import tpu as pltpu

BN_EPS = 1e-5
TILE_B_MAX = 4096   # <5 MiB/tile even at 4096 rows -> safe on v5e/v6e/v7x.
MIN_TILES = 2       # keep grid >= 2 so both v7x TensorCores get work.


def _round_up(n, m):
    return ((n + m - 1) // m) * m


def _choose_tiling(B):
    """Pad B only to a multiple of 128 and derive a lane-dense tile size."""
    b128 = _round_up(max(B, 1), 128)
    n_tiles = max(MIN_TILES, pl.cdiv(b128, TILE_B_MAX))
    tile_b = max(128, _round_up(pl.cdiv(b128, n_tiles), 128))
    grid = pl.cdiv(b128, tile_b)
    b_pad = grid * tile_b
    return tile_b, grid, b_pad


def _mlp_kernel(x_ref, w1_ref, b1_ref, w2_ref, b2_ref, w3t_ref, b3_ref, o_ref):
    # x_ref: (TILE_B, D) bf16 block; weights bf16; biases f32; accumulate f32.

    # Linear(D, 128) + ReLU   (BN1 already folded into w2/b2)
    h = jnp.dot(x_ref[...], w1_ref[...], preferred_element_type=jnp.float32)
    h = jnp.maximum(h + b1_ref[...], 0.0)

    # Linear(128, 64) + ReLU  (BN2 already folded into w3/b3)
    h = jnp.dot(h.astype(jnp.bfloat16), w2_ref[...],
                preferred_element_type=jnp.float32)
    h = jnp.maximum(h + b2_ref[...], 0.0)

    # Linear(64, 1), emitted as a trans-B dot so the store is lane-dense:
    #   out[0, j] = sum_k w3t[0, k] * h[j, k]   -> (1, TILE_B)
    # (contraction on the last dim of both operands -> no relayout of h needed)
    out = jax.lax.dot_general(
        w3t_ref[...], h.astype(jnp.bfloat16),
        dimension_numbers=(((1,), (1,)), ((), ())),
        preferred_element_type=jnp.float32,
    ) + b3_ref[0]
    o_ref[...] = out.astype(o_ref.dtype)


def fold_params(p, eps=BN_EPS):
    """Fold eval-mode BatchNorm into the following Linear layers (exact algebra)
    and cast matmul operands to bf16. Call ONCE outside the jitted forward."""
    s1 = p["g1"] * jax.lax.rsqrt(p["v1"] + eps)          # (1, 128)
    t1 = p["be1"] - p["m1"] * s1                         # (1, 128)
    s2 = p["g2"] * jax.lax.rsqrt(p["v2"] + eps)          # (1, 64)
    t2 = p["be2"] - p["m2"] * s2                         # (1, 64)

    w2f = p["w2"] * s1.reshape(-1, 1)                    # (128, 64)
    b2f = p["b2"] + t1 @ p["w2"]                         # (1, 64)
    w3f = p["w3"] * s2.reshape(-1, 1)                    # (64, 1)
    b3f = (p["b3"] + t2 @ p["w3"]).reshape(1)            # (1,)  scalar bias
    w3t = w3f.T                                          # (1, 64)

    return dict(
        w1=p["w1"].astype(jnp.bfloat16),
        b1=p["b1"].astype(jnp.float32),
        w2f=w2f.astype(jnp.bfloat16),
        b2f=b2f.astype(jnp.float32),
        w3t=w3t.astype(jnp.bfloat16),
        b3f=b3f.astype(jnp.float32),
    )


@functools.partial(jax.jit, static_argnames=())
def ev_sales_forward(x, fp):
    """x: (B, input_dim) float32. fp: dict from fold_params. Returns (B, 1) f32."""
    B, D = x.shape
    H1 = fp["w1"].shape[1]        # 128
    H2 = fp["w2f"].shape[1]       # 64

    tile_b, n_tiles, b_pad = _choose_tiling(B)
    x = x.astype(jnp.bfloat16)
    if b_pad != B:
        x = jnp.pad(x, ((0, b_pad - B), (0, 0)))

    cost = pl.CostEstimate(
        flops=2 * b_pad * (D * H1 + H1 * H2 + H2),
        transcendentals=0,
        bytes_accessed=(b_pad * D * 2 + b_pad * 4            # x in, out
                        + D * H1 * 2 + H1 * 4                 # w1, b1
                        + H1 * H2 * 2 + H2 * 4                # w2f, b2f
                        + H2 * 2 + 4),                        # w3t, b3f
    )

    out = pl.pallas_call(
        _mlp_kernel,
        out_shape=jax.ShapeDtypeStruct((1, b_pad), jnp.float32),
        grid=(n_tiles,),
        in_specs=[
            pl.BlockSpec((tile_b, D), lambda i: (i, 0)),     # x tile (streams)
            pl.BlockSpec((D, H1), lambda i: (0, 0)),         # w1 (resident)
            pl.BlockSpec((1, H1), lambda i: (0, 0)),         # b1
            pl.BlockSpec((H1, H2), lambda i: (0, 0)),        # w2 (BN1 folded)
            pl.BlockSpec((1, H2), lambda i: (0, 0)),         # b2 (BN1 folded)
            pl.BlockSpec((1, H2), lambda i: (0, 0)),         # w3^T (BN2 folded)
            pl.BlockSpec(memory_space=pltpu.MemorySpace.SMEM),  # b3 scalar
        ],
        out_specs=pl.BlockSpec((1, tile_b), lambda i: (0, i)),  # lane-dense row
        compiler_params=pltpu.CompilerParams(
            dimension_semantics=("parallel",),
        ),
        cost_estimate=cost,
    )(x, fp["w1"], fp["b1"], fp["w2f"], fp["b2f"], fp["w3t"], fp["b3f"])

    return out[0, :B].reshape(B, 1)


def init_params(input_dim, key):
    """PyTorch-shaped params; Linear weights stored transposed as (in, out)."""
    k1, k2, k3, kb1, kb2, kb3, kbn1, kbn2 = jax.random.split(key, 8)

    def linear(kw, kb, fan_in, fan_out):
        bound = 1.0 / jnp.sqrt(fan_in)
        w = jax.random.uniform(kw, (fan_in, fan_out), jnp.float32, -bound, bound)
        b = jax.random.uniform(kb, (1, fan_out), jnp.float32, -bound, bound)
        return w, b

    w1, b1 = linear(k1, kb1, input_dim, 128)
    w2, b2 = linear(k2, kb2, 128, 64)
    w3, b3 = linear(k3, kb3, 64, 1)

    def bn(n, k):
        # Non-trivial (as-if-trained) BN stats so the eval-mode fold is exercised.
        kg, kb_, km, kv = jax.random.split(k, 4)
        g = jax.random.uniform(kg, (1, n), jnp.float32, 0.5, 1.5)
        be = 0.1 * jax.random.normal(kb_, (1, n), jnp.float32)
        m = 0.1 * jax.random.normal(km, (1, n), jnp.float32)
        v = jax.random.uniform(kv, (1, n), jnp.float32, 0.5, 1.5)
        return g, be, m, v

    g1, be1, m1, v1 = bn(128, kbn1)
    g2, be2, m2, v2 = bn(64, kbn2)

    return dict(
        w1=w1, b1=b1, g1=g1, be1=be1, m1=m1, v1=v1,
        w2=w2, b2=b2, g2=g2, be2=be2, m2=m2, v2=v2,
        w3=w3, b3=b3,
    )


def _reference_forward(x, p):
    """Pure-JAX f32 reference with UNFOLDED params (eval semantics)."""
    h = jnp.maximum(x @ p["w1"] + p["b1"], 0.0)
    h = (h - p["m1"]) * jax.lax.rsqrt(p["v1"] + BN_EPS) * p["g1"] + p["be1"]
    h = jnp.maximum(h @ p["w2"] + p["b2"], 0.0)
    h = (h - p["m2"]) * jax.lax.rsqrt(p["v2"] + BN_EPS) * p["g2"] + p["be2"]
    return h @ p["w3"] + p["b3"]


if __name__ == "__main__":
    B, INPUT_DIM = 600, 32   # exercises two grid tiles (640 -> 2 x 384) + padding
    key = jax.random.PRNGKey(0)
    kx, kp = jax.random.split(key)

    x = jax.random.normal(kx, (B, INPUT_DIM), jnp.float32)
    params = init_params(INPUT_DIM, kp)

    folded = fold_params(params)          # fold BN + bf16 cast, once
    out = ev_sales_forward(x, folded)
    out = jax.block_until_ready(out)

    ref = _reference_forward(x, params)
    assert out.shape == (B, 1), out.shape
    # bf16 matmul operands (f32 accumulation) -> relaxed tolerance vs f32 ref.
    assert jnp.allclose(out, ref, atol=3e-2, rtol=3e-2), (
        "mismatch vs reference: max abs err "
        f"{float(jnp.max(jnp.abs(out - ref)))}")

    print("KERNEL_OK")
</pallas_src>

<mosaic_0001>
module attributes {stable_mosaic.version = 11 : i64} {
  func.func @_mlp_kernel(%arg0: i32, %arg1: memref<384x32xbf16, #tpu.memory_space<vmem>>, %arg2: memref<32x128xbf16, #tpu.memory_space<vmem>>, %arg3: memref<1x128xf32, #tpu.memory_space<vmem>>, %arg4: memref<128x64xbf16, #tpu.memory_space<vmem>>, %arg5: memref<1x64xf32, #tpu.memory_space<vmem>>, %arg6: memref<1x64xbf16, #tpu.memory_space<vmem>>, %arg7: memref<1xf32, #tpu.memory_space<smem>>, %arg8: memref<1x384xf32, #tpu.memory_space<vmem>>) attributes {dimension_semantics = [#tpu.dimension_semantics<parallel>], iteration_bounds = array<i64: 2>, scalar_prefetch = 0 : i64, scratch_operands = 0 : i64, tpu.core_type = #tpu.core_type<tc>, window_params = [{transform_indices = @transform_0, window_bounds = array<i64: 384, 32>}, {pipeline_mode = #tpu.pipeline_mode<synchronous>, transform_indices = @transform_1, window_bounds = array<i64: 32, 128>}, {pipeline_mode = #tpu.pipeline_mode<synchronous>, transform_indices = @transform_2, window_bounds = array<i64: 1, 128>}, {pipeline_mode = #tpu.pipeline_mode<synchronous>, transform_indices = @transform_3, window_bounds = array<i64: 128, 64>}, {pipeline_mode = #tpu.pipeline_mode<synchronous>, transform_indices = @transform_4, window_bounds = array<i64: 1, 64>}, {pipeline_mode = #tpu.pipeline_mode<synchronous>, transform_indices = @transform_5, window_bounds = array<i64: 1, 64>}, {transform_indices = @transform_6, window_bounds = array<i64: 1>}, {transform_indices = @transform_7, window_bounds = array<i64: 1, 384>}]} {
    %c0 = arith.constant 0 : index
    %c0_0 = arith.constant 0 : index
    %0 = vector.load %arg1[%c0, %c0_0] : memref<384x32xbf16, #tpu.memory_space<vmem>>, vector<384x32xbf16>
    %c0_1 = arith.constant 0 : index
    %c0_2 = arith.constant 0 : index
    %1 = vector.load %arg2[%c0_1, %c0_2] : memref<32x128xbf16, #tpu.memory_space<vmem>>, vector<32x128xbf16>
    %cst = arith.constant dense<0.000000e+00> : vector<384x128xf32>
    %2 = tpu.matmul %0, %1, %cst {dimension_numbers = #tpu.dot_dimension_numbers<[1], [0], [0], [1], [0, 0, 1, 1], [], []>} : vector<384x32xbf16>, vector<32x128xbf16>, vector<384x128xf32> -> vector<384x128xf32>
    %c0_3 = arith.constant 0 : index
    %c0_4 = arith.constant 0 : index
    %3 = vector.load %arg3[%c0_3, %c0_4] : memref<1x128xf32, #tpu.memory_space<vmem>>, vector<1x128xf32>
    %4 = vector.broadcast %3 : vector<1x128xf32> to vector<384x128xf32>
    %5 = arith.addf %2, %4 : vector<384x128xf32>
    %cst_5 = arith.constant 0.000000e+00 : f32
    %6 = vector.broadcast %cst_5 : f32 to vector<384x128xf32>
    %7 = arith.maximumf %5, %6 : vector<384x128xf32>
    %8 = arith.truncf %7 : vector<384x128xf32> to vector<384x128xbf16>
    %c0_6 = arith.constant 0 : index
    %c0_7 = arith.constant 0 : index
    %9 = vector.load %arg4[%c0_6, %c0_7] : memref<128x64xbf16, #tpu.memory_space<vmem>>, vector<128x64xbf16>
    %cst_8 = arith.constant dense<0.000000e+00> : vector<384x64xf32>
    %10 = tpu.matmul %8, %9, %cst_8 {dimension_numbers = #tpu.dot_dimension_numbers<[1], [0], [0], [1], [0, 0, 1, 1], [], []>} : vector<384x128xbf16>, vector<128x64xbf16>, vector<384x64xf32> -> vector<384x64xf32>
    %c0_9 = arith.constant 0 : index
    %c0_10 = arith.constant 0 : index
    %11 = vector.load %arg5[%c0_9, %c0_10] : memref<1x64xf32, #tpu.memory_space<vmem>>, vector<1x64xf32>
    %12 = vector.broadcast %11 : vector<1x64xf32> to vector<384x64xf32>
    %13 = arith.addf %10, %12 : vector<384x64xf32>
    %cst_11 = arith.constant 0.000000e+00 : f32
    %14 = vector.broadcast %cst_11 : f32 to vector<384x64xf32>
    %15 = arith.maximumf %13, %14 : vector<384x64xf32>
    %c0_12 = arith.constant 0 : index
    %c0_13 = arith.constant 0 : index
    %16 = vector.load %arg6[%c0_12, %c0_13] : memref<1x64xbf16, #tpu.memory_space<vmem>>, vector<1x64xbf16>
    %17 = arith.truncf %15 : vector<384x64xf32> to vector<384x64xbf16>
    %cst_14 = arith.constant dense<0.000000e+00> : vector<1x384xf32>
    %18 = tpu.matmul %16, %17, %cst_14 {dimension_numbers = #tpu.dot_dimension_numbers<[1], [1], [0], [0], [0, 0, 1, 0], [], []>} : vector<1x64xbf16>, vector<384x64xbf16>, vector<1x384xf32> -> vector<1x384xf32>
    %c0_15 = arith.constant 0 : index
    %19 = memref.load %arg7[%c0_15] : memref<1xf32, #tpu.memory_space<smem>>
    %20 = vector.broadcast %19 : f32 to vector<1x384xf32>
    %21 = arith.addf %18, %20 : vector<1x384xf32>
    %c0_16 = arith.constant 0 : index
    %c0_17 = arith.constant 0 : index
    %22 = vector.load %arg8[%c0_16, %c0_17] : memref<1x384xf32, #tpu.memory_space<vmem>>, vector<1x384xf32>
    tpu.vector_store %arg8[%c0_16, %c0_17], %21 {strides = array<i32>} : memref<1x384xf32, #tpu.memory_space<vmem>>, vector<1x384xf32>,
    return
  }
  func.func @transform_0(%arg0: i32) -> (i32, i32) {
    %c0_i32 = arith.constant 0 : i32
    %c0_i32_0 = arith.constant 0 : i32
    return %arg0, %c0_i32 : i32, i32
  }
  func.func @transform_1(%arg0: i32) -> (i32, i32) {
    %c0_i32 = arith.constant 0 : i32
    %c0_i32_0 = arith.constant 0 : i32
    %c0_i32_1 = arith.constant 0 : i32
    return %c0_i32, %c0_i32_0 : i32, i32
  }
  func.func @transform_2(%arg0: i32) -> (i32, i32) {
    %c0_i32 = arith.constant 0 : i32
    %c0_i32_0 = arith.constant 0 : i32
    %c0_i32_1 = arith.constant 0 : i32
    return %c0_i32, %c0_i32_0 : i32, i32
  }
  func.func @transform_3(%arg0: i32) -> (i32, i32) {
    %c0_i32 = arith.constant 0 : i32
    %c0_i32_0 = arith.constant 0 : i32
    %c0_i32_1 = arith.constant 0 : i32
    return %c0_i32, %c0_i32_0 : i32, i32
  }
  func.func @transform_4(%arg0: i32) -> (i32, i32) {
    %c0_i32 = arith.constant 0 : i32
    %c0_i32_0 = arith.constant 0 : i32
    %c0_i32_1 = arith.constant 0 : i32
    return %c0_i32, %c0_i32_0 : i32, i32
  }
  func.func @transform_5(%arg0: i32) -> (i32, i32) {
    %c0_i32 = arith.constant 0 : i32
    %c0_i32_0 = arith.constant 0 : i32
    %c0_i32_1 = arith.constant 0 : i32
    return %c0_i32, %c0_i32_0 : i32, i32
  }
  func.func @transform_6(%arg0: i32) -> i32 {
    %c0_i32 = arith.constant 0 : i32
    %c0_i32_0 = arith.constant 0 : i32
    return %c0_i32 : i32
  }
  func.func @transform_7(%arg0: i32) -> (i32, i32) {
    %c0_i32 = arith.constant 0 : i32
    %c0_i32_0 = arith.constant 0 : i32
    return %c0_i32, %arg0 : i32, i32
  }
}

</mosaic_0001>

<llo_original>
// kernel: ev_sales_forward.1
$region0: #{ev_sales_forward.1}
  #allocation0 [shape = 'u32[]', space=smem, size = 0x4, offset = 0x4, fixed_abs, tag = 'smem constant byte address 0x4 - core index']
  #allocation1 [shape = 'u32[144,128]{1,0:T(1,128)}', space=vmem, size = 0x12000, scoped, tag = 'internal scratch']
  #allocation2 [shape = 'f32[1]{0:T(128)S(6)}', space=smem, size = 0x200, scoped, tag = 'scoped memory for ev_sales_forward.1']
  %s0 = inlined_call_operand.vmem [shape: bf16[768,32], index: 0, kind: input, shape index: {}]
  %s1 = inlined_call_operand.vmem [shape: bf16[32,128], index: 1, kind: input, shape index: {}]
  %s2 = inlined_call_operand.vmem [shape: f32[1,128], index: 2, kind: input, shape index: {}]
  %s3 = inlined_call_operand.vmem [shape: bf16[128,64], index: 3, kind: input, shape index: {}]
  %s4 = inlined_call_operand.vmem [shape: f32[1,64], index: 4, kind: input, shape index: {}]
  %s5 = inlined_call_operand.vmem [shape: bf16[1,64], index: 5, kind: input, shape index: {}]
  %s6 = inlined_call_operand.<no memory space> [shape: f32[1], index: 6, kind: input, shape index: {}]
  %s7 = inlined_call_operand.vmem [shape: f32[1,768], index: 7, kind: output, shape index: {}]
  %s8 = sld [smem:[#allocation0]]
  $region61: #{ev_sales_forward.1} parent=0
    _
  %s10 = ssub.s32 1, %s8
  %s11 = scalar_select 0, %s10, %s8
  %12 = sst [smem:[#allocation2]] %s6
  loop: start=0, step=1, limit=4
  $region2: #{ev_sales_forward.1} parent=0 // loop_pre_header
    _
  $region3: #{ev_sales_forward.1} parent=0 // loop_header
    %s14 = sphi 0, %s18
    %p15 = scmp.ge.s32.totalorder %s14, 4
    %s24 = sphi 0, %s26
    %s27 = sphi 0, %s24
    %s28 = sphi 0, %s27
    %s44 = sphi 0, %s28
    %s48 = sphi 0, %s48
    %s50 = sphi 0, %s48
    %s51 = sphi 0, %s50
    %s65 = sphi 0, %s51
    %s69 = sphi 0, %s69
    %s71 = sphi 0, %s69
    %s72 = sphi 0, %s71
    %s86 = sphi 0, %s72
    %s90 = sphi 0, %s90
    %s92 = sphi 0, %s90
    %s93 = sphi 0, %s92
    %s107 = sphi 0, %s93
    %s111 = sphi 0, %s111
    %s113 = sphi 0, %s111
    %s114 = sphi 0, %s113
    %s128 = sphi 0, %s114
    %s132 = sphi 0, %s132
    %s134 = sphi 0, %s132
    %s135 = sphi 0, %s134
    %s149 = sphi 0, %s135
    %s153 = sphi 0, %s153
    %s155 = sphi 0, %s153
    %s156 = sphi 0, %s155
    %s170 = sphi 0, %s156
    %s176 = sphi 0, %s178
    %s179 = sphi 0, %s176
    %s180 = sphi 0, %s179
    %s196 = sphi 0, %s180
  $region4: #{ev_sales_forward.1} parent=0 // loop_header_branch
    %17 = sbr.rel (%p15) target = $region8
  $region5: #{ev_sales_forward.1} parent=0 // loop_body
    %s19 = ssub.s32 %s14, 1
    %s20 = ssub.s32 %s14, 2
    %s21 = sadd.s32 %s14, 1
    %s22 = ssub.s32 %s14, %s21
    %p23 = scmp.eq.s32.totalorder %s22, 0
    %s25 = sadd.s32 %s24, 1
    %s26 = scalar_select %p23, %s24, %s25
    %p29 = pneg %p23
    %p30 = scmp.eq.s32.totalorder %s14, 1
    %p31 = por %p29, %p30
    %p32 = scmp.ne.s32.totalorder %s24, %s27
    %p33 = scmp.eq.s32.totalorder %s14, 0
    %p34 = por %p32, %p33
    %p35 = scmp.ne.s32.totalorder %s24, %s27
    %p36 = scmp.eq.s32.totalorder %s19, 1
    %p37 = por %p35, %p36
    %p38 = scmp.ne.s32.totalorder %s27, %s28
    %p39 = scmp.eq.s32.totalorder %s19, 0
    %p40 = por %p38, %p39
    %p41 = scmp.ne.s32.totalorder %s27, %s28
    %p42 = scmp.eq.s32.totalorder %s20, 1
    %p43 = por %p41, %p42
    %p45 = scmp.ne.s32.totalorder %s28, %s44
    %p46 = scmp.eq.s32.totalorder %s20, 0
    %p47 = por %p45, %p46
    %s49 = sadd.s32 %s48, 1
    %p52 = scmp.eq.s32.totalorder %s14, 1
    %p53 = scmp.ne.s32.totalorder %s48, %s50
    %p54 = scmp.eq.s32.totalorder %s14, 0
    %p55 = por %p53, %p54
    %p56 = scmp.ne.s32.totalorder %s48, %s50
    %p57 = scmp.eq.s32.totalorder %s19, 1
    %p58 = por %p56, %p57
    %p59 = scmp.ne.s32.totalorder %s50, %s51
    %p60 = scmp.eq.s32.totalorder %s19, 0
    %p61 = por %p59, %p60
    %p62 = scmp.ne.s32.totalorder %s50, %s51
    %p63 = scmp.eq.s32.totalorder %s20, 1
    %p64 = por %p62, %p63
    %p66 = scmp.ne.s32.totalorder %s51, %s65
    %p67 = scmp.eq.s32.totalorder %s20, 0
    %p68 = por %p66, %p67
    %s70 = sadd.s32 %s69, 1
    %p73 = scmp.eq.s32.totalorder %s14, 1
    %p74 = scmp.ne.s32.totalorder %s69, %s71
    %p75 = scmp.eq.s32.totalorder %s14, 0
    %p76 = por %p74, %p75
    %p77 = scmp.ne.s32.totalorder %s69, %s71
    %p78 = scmp.eq.s32.totalorder %s19, 1
    %p79 = por %p77, %p78
    %p80 = scmp.ne.s32.totalorder %s71, %s72
    %p81 = scmp.eq.s32.totalorder %s19, 0
    %p82 = por %p80, %p81
    %p83 = scmp.ne.s32.totalorder %s71, %s72
    %p84 = scmp.eq.s32.totalorder %s20, 1
    %p85 = por %p83, %p84
    %p87 = scmp.ne.s32.totalorder %s72, %s86
    %p88 = scmp.eq.s32.totalorder %s20, 0
    %p89 = por %p87, %p88
    %s91 = sadd.s32 %s90, 1
    %p94 = scmp.eq.s32.totalorder %s14, 1
    %p95 = scmp.ne.s32.totalorder %s90, %s92
    %p96 = scmp.eq.s32.totalorder %s14, 0
    %p97 = por %p95, %p96
    %p98 = scmp.ne.s32.totalorder %s90, %s92
    %p99 = scmp.eq.s32.totalorder %s19, 1
    %p100 = por %p98, %p99
    %p101 = scmp.ne.s32.totalorder %s92, %s93
    %p102 = scmp.eq.s32.totalorder %s19, 0
    %p103 = por %p101, %p102
    %p104 = scmp.ne.s32.totalorder %s92, %s93
    %p105 = scmp.eq.s32.totalorder %s20, 1
    %p106 = por %p104, %p105
    %p108 = scmp.ne.s32.totalorder %s93, %s107
    %p109 = scmp.eq.s32.totalorder %s20, 0
    %p110 = por %p108, %p109
    %s112 = sadd.s32 %s111, 1
    %p115 = scmp.eq.s32.totalorder %s14, 1
    %p116 = scmp.ne.s32.totalorder %s111, %s113
    %p117 = scmp.eq.s32.totalorder %s14, 0
    %p118 = por %p116, %p117
    %p119 = scmp.ne.s32.totalorder %s111, %s113
    %p120 = scmp.eq.s32.totalorder %s19, 1
    %p121 = por %p119, %p120
    %p122 = scmp.ne.s32.totalorder %s113, %s114
    %p123 = scmp.eq.s32.totalorder %s19, 0
    %p124 = por %p122, %p123
    %p125 = scmp.ne.s32.totalorder %s113, %s114
    %p126 = scmp.eq.s32.totalorder %s20, 1
    %p127 = por %p125, %p126
    %p129 = scmp.ne.s32.totalorder %s114, %s128
    %p130 = scmp.eq.s32.totalorder %s20, 0
    %p131 = por %p129, %p130
    %s133 = sadd.s32 %s132, 1
    %p136 = scmp.eq.s32.totalorder %s14, 1
    %p137 = scmp.ne.s32.totalorder %s132, %s134
    %p138 = scmp.eq.s32.totalorder %s14, 0
    %p139 = por %p137, %p138
    %p140 = scmp.ne.s32.totalorder %s132, %s134
    %p141 = scmp.eq.s32.totalorder %s19, 1
    %p142 = por %p140, %p141
    %p143 = scmp.ne.s32.totalorder %s134, %s135
    %p144 = scmp.eq.s32.totalorder %s19, 0
    %p145 = por %p143, %p144
    %p146 = scmp.ne.s32.totalorder %s134, %s135
    %p147 = scmp.eq.s32.totalorder %s20, 1
    %p148 = por %p146, %p147
    %p150 = scmp.ne.s32.totalorder %s135, %s149
    %p151 = scmp.eq.s32.totalorder %s20, 0
    %p152 = por %p150, %p151
    %s154 = sadd.s32 %s153, 1
    %p157 = scmp.eq.s32.totalorder %s14, 1
    %p158 = scmp.ne.s32.totalorder %s153, %s155
    %p159 = scmp.eq.s32.totalorder %s14, 0
    %p160 = por %p158, %p159
    %p161 = scmp.ne.s32.totalorder %s153, %s155
    %p162 = scmp.eq.s32.totalorder %s19, 1
    %p163 = por %p161, %p162
    %p164 = scmp.ne.s32.totalorder %s155, %s156
    %p165 = scmp.eq.s32.totalorder %s19, 0
    %p166 = por %p164, %p165
    %p167 = scmp.ne.s32.totalorder %s155, %s156
    %p168 = scmp.eq.s32.totalorder %s20, 1
    %p169 = por %p167, %p168
    %p171 = scmp.ne.s32.totalorder %s156, %s170
    %p172 = scmp.eq.s32.totalorder %s20, 0
    %p173 = por %p171, %p172
    %s174 = ssub.s32 %s14, %s21
    %p175 = scmp.eq.s32.totalorder %s174, 0
    %s177 = sadd.s32 %s176, 1
    %s178 = scalar_select %p175, %s176, %s177
    %p181 = pneg %p175
    %p182 = scmp.eq.s32.totalorder %s14, 1
    %p183 = por %p181, %p182
    %p184 = scmp.ne.s32.totalorder %s176, %s179
    %p185 = scmp.eq.s32.totalorder %s14, 0
    %p186 = por %p184, %p185
    %p187 = scmp.ne.s32.totalorder %s176, %s179
    %p188 = scmp.eq.s32.totalorder %s19, 1
    %p189 = por %p187, %p188
    %p190 = scmp.ne.s32.totalorder %s179, %s180
    %p191 = scmp.eq.s32.totalorder %s19, 0
    %p192 = por %p190, %p191
    %p193 = scmp.ne.s32.totalorder %s179, %s180
    %p194 = scmp.eq.s32.totalorder %s20, 1
    %p195 = por %p193, %p194
    %p197 = scmp.ne.s32.totalorder %s180, %s196
    %p198 = scmp.eq.s32.totalorder %s20, 0
    %p199 = por %p197, %p198
    %p200 = scmp.le.s32.totalorder 1, %s14
    %p201 = scmp.lt.s32.totalorder %s14, 3
    %p202 = pnand %p200, %p201
    %p203 = pneg %p202
    // Predicated region
    $region9: #{ev_sales_forward.1} parent=5 // pred_check
      _
    $region10: #{ev_sales_forward.1} parent=5 // pred_check_branch
      %205 = sbr.rel (%p202) target = $region12
    $region11: #{ev_sales_forward.1} parent=5 // pred_region
      %s206 = ssub.s32 %s14, 1
      // Predicated region
      $region13: #{ev_sales_forward.1} parent=11 // pred_check
        %p207 = pneg %p61
      $region14: #{ev_sales_forward.1} parent=11 // pred_check_branch
        %209 = sbr.rel (%p207) target = $region16
      $region15: #{ev_sales_forward.1} parent=11 // pred_region
        _
      $region16: #{ev_sales_forward.1} parent=11 // pred_fallthru
        _
      // Predicated region
      $region17: #{ev_sales_forward.1} parent=11 // pred_check
        %p210 = pneg %p82
      $region18: #{ev_sales_forward.1} parent=11 // pred_check_branch
        %212 = sbr.rel (%p210) target = $region20
      $region19: #{ev_sales_forward.1} parent=11 // pred_region
        _
      $region20: #{ev_sales_forward.1} parent=11 // pred_fallthru
        _
      // Predicated region
      $region21: #{ev_sales_forward.1} parent=11 // pred_check
        %p213 = pneg %p103
      $region22: #{ev_sales_forward.1} parent=11 // pred_check_branch
        %215 = sbr.rel (%p213) target = $region24
      $region23: #{ev_sales_forward.1} parent=11 // pred_region
        _
      $region24: #{ev_sales_forward.1} parent=11 // pred_fallthru
        _
      // Predicated region
      $region25: #{ev_sales_forward.1} parent=11 // pred_check
        %p216 = pneg %p124
      $region26: #{ev_sales_forward.1} parent=11 // pred_check_branch
        %218 = sbr.rel (%p216) target = $region28
      $region27: #{ev_sales_forward.1} parent=11 // pred_region
        _
      $region28: #{ev_sales_forward.1} parent=11 // pred_fallthru
        _
      // Predicated region
      $region29: #{ev_sales_forward.1} parent=11 // pred_check
        %p219 = pneg %p145
      $region30: #{ev_sales_forward.1} parent=11 // pred_check_branch
        %221 = sbr.rel (%p219) target = $region32
      $region31: #{ev_sales_forward.1} parent=11 // pred_region
        _
      $region32: #{ev_sales_forward.1} parent=11 // pred_fallthru
        _
      // Predicated region
      $region33: #{ev_sales_forward.1} parent=11 // pred_check
        %p222 = pneg %p166
      $region34: #{ev_sales_forward.1} parent=11 // pred_check_branch
        %224 = sbr.rel (%p222) target = $region36
      $region35: #{ev_sales_forward.1} parent=11 // pred_region
        _
      $region36: #{ev_sales_forward.1} parent=11 // pred_fallthru
        _
    $region12: #{ev_sales_forward.1} parent=5 // pred_fallthru
      _
    %p225 = scmp.lt.s32.totalorder %s14, 2
    // Predicated region
    $region37: #{ev_sales_forward.1} parent=5 // pred_check
      %p226 = pneg %p225
    $region38: #{ev_sales_forward.1} parent=5 // pred_check_branch
      %228 = sbr.rel (%p226) target = $region40
    $region39: #{ev_sales_forward.1} parent=5 // pred_region
      // Predicated region
      $region41: #{ev_sales_forward.1} parent=39 // pred_check
        %p229 = pneg %p34
      $region42: #{ev_sales_forward.1} parent=39 // pred_check_branch
        %231 = sbr.rel (%p229) target = $region44
      $region43: #{ev_sales_forward.1} parent=39 // pred_region
        %s232 = smul.u32 48, %s14
        %p233 = scmp.lt.s32.totalorder %s232, 95
        %s234 = scalar_select %p233, %s232, 95
        %s235 = smul.addr %s234, 4
        %s236 = scalar_lea.vmem %s0, %s235
        %s237 = smul.u32 48, %s14
      $region44: #{ev_sales_forward.1} parent=39 // pred_fallthru
        _
    $region40: #{ev_sales_forward.1} parent=5 // pred_fallthru
      _
    %p238 = scmp.le.s32.totalorder 1, %s14
    %p239 = scmp.lt.s32.totalorder %s14, 3
    %p240 = pnand %p238, %p239
    %p241 = pneg %p240
    // Predicated region
    $region45: #{ev_sales_forward.1} parent=5 // pred_check
      _
    $region46: #{ev_sales_forward.1} parent=5 // pred_check_branch
      %243 = sbr.rel (%p240) target = $region48
    $region47: #{ev_sales_forward.1} parent=5 // pred_region
      %s244 = ssub.s32 %s14, 1
      %s245 = smul.u32 48, %s19
      %p246 = scmp.lt.s32.totalorder %s245, 95
      %s247 = scalar_select %p246, %s245, 95
      %s248 = smul.addr %s247, 4
      %s249 = scalar_lea.vmem %s0, %s248
      %p250 = pneg %p40
      %p251 = pneg %p37
      %p252 = pneg %p61
      %p253 = pneg %p58
      %p254 = pneg %p82
      %p255 = pneg %p79
      %p256 = pneg %p103
      %p257 = pneg %p100
      %p258 = pneg %p124
      %p259 = pneg %p121
      %p260 = pneg %p145
      %p261 = pneg %p142
      %p262 = pneg %p166
      %p263 = pneg %p163
      %p264 = pneg %p192
      %p265 = pneg %p189
      %s266 = smul.u32 3, %s19
      %p267 = scmp.lt.s32.totalorder %s266, 5
      %s268 = scalar_select %p267, %s266, 5
      %s269 = scalar_lea.vmem %s7, %s268
      %s270 = smul.u32 48, %s19
      %p271 = scmp.lt.s32.totalorder %s270, 95
      %s272 = scalar_select %p271, %s270, 95
      %s273 = smul.addr %s272, 4
      %s274 = scalar_lea.vmem %s0, %s273
      %s275 = smul.u32 48, %s19
      %s276 = smul.u32 3, %s19
      %p277 = scmp.lt.s32.totalorder %s276, 5
      %s278 = scalar_select %p277, %s276, 5
      %s279 = scalar_lea.vmem %s7, %s278
      %s280 = smul.u32 3, %s19
      %v282 = vld [vmem:[%s274] sm:$0xf]
      %v283 = vld [vmem:[%s274 + $0x4] sm:$0xf]
      %v284 = vld [vmem:[%s274 + $0x8] sm:$0xf]
      %v285 = vld [vmem:[%s274 + $0xc] sm:$0xf]
      %v286 = vld [vmem:[%s274 + $0x10] sm:$0xf]
      %v287 = vld [vmem:[%s274 + $0x14] sm:$0xf]
      %v288 = vld [vmem:[%s274 + $0x18] sm:$0xf]
      %v289 = vld [vmem:[%s274 + $0x1c] sm:$0xf]
      %v290 = vld [vmem:[%s274 + $0x20] sm:$0xf]
      %v291 = vld [vmem:[%s274 + $0x24] sm:$0xf]
      %v292 = vld [vmem:[%s274 + $0x28] sm:$0xf]
      %v293 = vld [vmem:[%s274 + $0x2c] sm:$0xf]
      %v294 = vld [vmem:[%s274 + $0x30] sm:$0xf]
      %v295 = vld [vmem:[%s274 + $0x34] sm:$0xf]
      %v296 = vld [vmem:[%s274 + $0x38] sm:$0xf]
      %v297 = vld [vmem:[%s274 + $0x3c] sm:$0xf]
      %v298 = vld [vmem:[%s274 + $0x40] sm:$0xf]
      %v299 = vld [vmem:[%s274 + $0x44] sm:$0xf]
      %v300 = vld [vmem:[%s274 + $0x48] sm:$0xf]
      %v301 = vld [vmem:[%s274 + $0x4c] sm:$0xf]
      %v302 = vld [vmem:[%s274 + $0x50] sm:$0xf]
      %v303 = vld [vmem:[%s274 + $0x54] sm:$0xf]
      %v304 = vld [vmem:[%s274 + $0x58] sm:$0xf]
      %v305 = vld [vmem:[%s274 + $0x5c] sm:$0xf]
      %v306 = vld [vmem:[%s274 + $0x60] sm:$0xf]
      %v307 = vld [vmem:[%s274 + $0x64] sm:$0xf]
      %v308 = vld [vmem:[%s274 + $0x68] sm:$0xf]
      %v309 = vld [vmem:[%s274 + $0x6c] sm:$0xf]
      %v310 = vld [vmem:[%s274 + $0x70] sm:$0xf]
      %v311 = vld [vmem:[%s274 + $0x74] sm:$0xf]
      %v312 = vld [vmem:[%s274 + $0x78] sm:$0xf]
      %v313 = vld [vmem:[%s274 + $0x7c] sm:$0xf]
      %v314 = vld [vmem:[%s274 + $0x80] sm:$0xf]
      %v315 = vld [vmem:[%s274 + $0x84] sm:$0xf]
      %v316 = vld [vmem:[%s274 + $0x88] sm:$0xf]
      %v317 = vld [vmem:[%s274 + $0x8c] sm:$0xf]
      %v318 = vld [vmem:[%s274 + $0x90] sm:$0xf]
      %v319 = vld [vmem:[%s274 + $0x94] sm:$0xf]
      %v320 = vld [vmem:[%s274 + $0x98] sm:$0xf]
      %v321 = vld [vmem:[%s274 + $0x9c] sm:$0xf]
      %v322 = vld [vmem:[%s274 + $0xa0] sm:$0xf]
      %v323 = vld [vmem:[%s274 + $0xa4] sm:$0xf]
      %v324 = vld [vmem:[%s274 + $0xa8] sm:$0xf]
      %v325 = vld [vmem:[%s274 + $0xac] sm:$0xf]
      %v326 = vld [vmem:[%s274 + $0xb0] sm:$0xf]
      %v327 = vld [vmem:[%s274 + $0xb4] sm:$0xf]
      %v328 = vld [vmem:[%s274 + $0xb8] sm:$0xf]
      %v329 = vld [vmem:[%s274 + $0xbc] sm:$0xf]
      %v330 = vld [vmem:[%s1] sm:$0xf]
      %v331 = vld [vmem:[%s1 + $0x4] sm:$0xf]
      %v332 = vld [vmem:[%s1 + $0x8] sm:$0xf]
      %v333 = vld [vmem:[%s1 + $0xc] sm:$0xf]
      %v334 = vld [vmem:[%s2] sm:$0x1]
      %v336 = vlaneseq
      %v337 = vshrl.u32 %v336, 7
      %v338 = vsub.s32 0, %v337
      %v339 = vrot.slane %v334, %v338
      %v389 = vunpack.c.l.b16 %v282
      %v390 = vunpack.c.l.b16 %v283
      %v391 = vunpack.c.l.b16 %v284
      %v392 = vunpack.c.l.b16 %v285
      %v393 = vunpack.c.l.b16 %v286
      %v394 = vunpack.c.l.b16 %v287
      %v395 = vunpack.c.l.b16 %v288
      %v396 = vunpack.c.l.b16 %v289
      %v397 = vunpack.c.l.b16 %v290
      %v398 = vunpack.c.l.b16 %v291
      %v399 = vunpack.c.l.b16 %v292
      %v400 = vunpack.c.l.b16 %v293
      %v401 = vunpack.c.l.b16 %v294
      %v402 = vunpack.c.l.b16 %v295
      %v403 = vunpack.c.l.b16 %v296
      %v404 = vunpack.c.l.b16 %v297
      %v405 = vunpack.c.l.b16 %v298
      %v406 = vunpack.c.l.b16 %v299
      %v407 = vunpack.c.l.b16 %v300
      %v408 = vunpack.c.l.b16 %v301
      %v409 = vunpack.c.l.b16 %v302
      %v410 = vunpack.c.l.b16 %v303
      %v411 = vunpack.c.l.b16 %v304
      %v412 = vunpack.c.l.b16 %v305
      %v413 = vunpack.c.l.b16 %v306
      %v414 = vunpack.c.l.b16 %v307
      %v415 = vunpack.c.l.b16 %v308
      %v416 = vunpack.c.l.b16 %v309
      %v417 = vunpack.c.l.b16 %v310
      %v418 = vunpack.c.l.b16 %v311
      %v419 = vunpack.c.l.b16 %v312
      %v420 = vunpack.c.l.b16 %v313
      %v421 = vunpack.c.l.b16 %v314
      %v422 = vunpack.c.l.b16 %v315
      %v423 = vunpack.c.l.b16 %v316
      %v424 = vunpack.c.l.b16 %v317
      %v425 = vunpack.c.l.b16 %v318
      %v426 = vunpack.c.l.b16 %v319
      %v427 = vunpack.c.l.b16 %v320
      %v428 = vunpack.c.l.b16 %v321
      %v429 = vunpack.c.l.b16 %v322
      %v430 = vunpack.c.l.b16 %v323
      %v431 = vunpack.c.l.b16 %v324
      %v432 = vunpack.c.l.b16 %v325
      %v433 = vunpack.c.l.b16 %v326
      %v434 = vunpack.c.l.b16 %v327
      %v435 = vunpack.c.l.b16 %v328
      %v436 = vunpack.c.l.b16 %v329
      %v437 = vpack.c.b16 %v390, %v389
      %v438 = vpack.c.b16 %v392, %v391
      %v439 = vpack.c.b16 %v394, %v393
      %v440 = vpack.c.b16 %v396, %v395
      %v441 = vpack.c.b16 %v398, %v397
      %v442 = vpack.c.b16 %v400, %v399
      %v443 = vpack.c.b16 %v402, %v401
      %v444 = vpack.c.b16 %v404, %v403
      %v445 = vpack.c.b16 %v406, %v405
      %v446 = vpack.c.b16 %v408, %v407
      %v447 = vpack.c.b16 %v410, %v409
      %v448 = vpack.c.b16 %v412, %v411
      %v449 = vpack.c.b16 %v414, %v413
      %v450 = vpack.c.b16 %v416, %v415
      %v451 = vpack.c.b16 %v418, %v417
      %v452 = vpack.c.b16 %v420, %v419
      %v453 = vpack.c.b16 %v422, %v421
      %v454 = vpack.c.b16 %v424, %v423
      %v455 = vpack.c.b16 %v426, %v425
      %v456 = vpack.c.b16 %v428, %v427
      %v457 = vpack.c.b16 %v430, %v429
      %v458 = vpack.c.b16 %v432, %v431
      %v459 = vpack.c.b16 %v434, %v433
      %v460 = vpack.c.b16 %v436, %v435
      %v465 = vunpack.c.l.b16 %v330
      %v466 = vunpack.c.l.b16 %v331
      %v467 = vunpack.c.l.b16 %v332
      %v468 = vunpack.c.l.b16 %v333
      %v469 = vpack.c.b16 %v466, %v465
      %v470 = vpack.c.b16 %v468, %v467
      %vm473 = vcmask 261120
      %v475 = vsel %vm473, %v437, 0
      %v478 = vsel %vm473, %v438, 0
      %v481 = vsel %vm473, %v439, 0
      %v484 = vsel %vm473, %v440, 0
      %v487 = vsel %vm473, %v441, 0
      %v490 = vsel %vm473, %v442, 0
      %v493 = vsel %vm473, %v443, 0
      %v496 = vsel %vm473, %v444, 0
      %v499 = vsel %vm473, %v445, 0
      %v502 = vsel %vm473, %v446, 0
      %v505 = vsel %vm473, %v447, 0
      %v508 = vsel %vm473, %v448, 0
      %v511 = vsel %vm473, %v449, 0
      %v514 = vsel %vm473, %v450, 0
      %v517 = vsel %vm473, %v451, 0
      %v520 = vsel %vm473, %v452, 0
      %v523 = vsel %vm473, %v453, 0
      %v526 = vsel %vm473, %v454, 0
      %v529 = vsel %vm473, %v455, 0
      %v532 = vsel %vm473, %v456, 0
      %v535 = vsel %vm473, %v457, 0
      %v538 = vsel %vm473, %v458, 0
      %v541 = vsel %vm473, %v459, 0
      %v544 = vsel %vm473, %v460, 0
      %546 = vmatprep.subr.bf16.mxu0 0
      %547 = vmatpush1.bf16.msra.mxu0 %v469
      %548 = vmatprep.subr.bf16.mxu0 0
      %549 = vmatpush1.bf16.msra.mxu0 %v470
      %550 = vmatprep.subr.bf16.mxu0 0
      %551 = vmatpush1.bf16.msra.mxu0 0
      %552 = vmatprep.subr.bf16.mxu0 0
      %553 = vmatpush1.bf16.msra.mxu0 0
      %554 = vmatprep.subr.bf16.mxu0 0
      %555 = vmatpush1.bf16.msra.mxu0 0
      %556 = vmatprep.subr.bf16.mxu0 0
      %557 = vmatpush1.bf16.msra.mxu0 0
      %558 = vmatprep.subr.bf16.mxu0 0
      %559 = vmatpush1.bf16.msra.mxu0 0
      %560 = vmatprep.subr.bf16.mxu0 0
      %561 = vmatpush1.bf16.msra.mxu0 0
      %562 = vmatprep.subr.bf16.mxu0 0
      %563 = vmatpush1.bf16.msra.mxu0 0
      %564 = vmatprep.subr.bf16.mxu0 0
      %565 = vmatpush1.bf16.msra.mxu0 0
      %566 = vmatprep.subr.bf16.mxu0 0
      %567 = vmatpush1.bf16.msra.mxu0 0
      %568 = vmatprep.subr.bf16.mxu0 0
      %569 = vmatpush1.bf16.msra.mxu0 0
      %570 = vmatprep.subr.bf16.mxu0 0
      %571 = vmatpush1.bf16.msra.mxu0 0
      %572 = vmatprep.subr.bf16.mxu0 0
      %573 = vmatpush1.bf16.msra.mxu0 0
      %574 = vmatprep.subr.bf16.mxu0 0
      %575 = vmatpush1.bf16.msra.mxu0 0
      %576 = vmatprep.subr.bf16.mxu0 0
      %577 = vmatpush1.bf16.msra.mxu0 0
      %578 = vmatprep.mubr.bf16.mxu0 0
      %579 = vmatmul.mubr.bf16.gmra.mrb[0].mxu0 %v475
      %v580 = vpop.f32.mrb[0].mxu0
      %v581 = vadd.f32 %v339, %v580
      %v582 = vpop.f32.mrb[0].mxu0
      %v583 = vpop.f32.mrb[0].mxu0
      %v584 = vadd.f32 %v339, %v583
      %v585 = vpop.f32.mrb[0].mxu0
      %586 = vmatprep.mubr.bf16.mxu0 0
      %587 = vmatmul.mubr.bf16.gmra.mrb[0].mxu0 %v478
      %v588 = vpop.f32.mrb[0].mxu0
      %v589 = vadd.f32 %v339, %v588
      %v590 = vpop.f32.mrb[0].mxu0
      %v591 = vpop.f32.mrb[0].mxu0
      %v592 = vadd.f32 %v339, %v591
      %v593 = vpop.f32.mrb[0].mxu0
      %594 = vmatprep.mubr.bf16.mxu0 0
      %595 = vmatmul.mubr.bf16.gmra.mrb[0].mxu0 %v481
      %v596 = vpop.f32.mrb[0].mxu0
      %v597 = vadd.f32 %v339, %v596
      %v598 = vpop.f32.mrb[0].mxu0
      %v599 = vpop.f32.mrb[0].mxu0
      %v600 = vadd.f32 %v339, %v599
      %v601 = vpop.f32.mrb[0].mxu0
      %602 = vmatprep.mubr.bf16.mxu0 0
      %603 = vmatmul.mubr.bf16.gmra.mrb[0].mxu0 %v484
      %v604 = vpop.f32.mrb[0].mxu0
      %v605 = vadd.f32 %v339, %v604
      %v606 = vpop.f32.mrb[0].mxu0
      %v607 = vpop.f32.mrb[0].mxu0
      %v608 = vadd.f32 %v339, %v607
      %v609 = vpop.f32.mrb[0].mxu0
      %610 = vmatprep.mubr.bf16.mxu0 0
      %611 = vmatmul.mubr.bf16.gmra.mrb[0].mxu0 %v487
      %v612 = vpop.f32.mrb[0].mxu0
      %v613 = vadd.f32 %v339, %v612
      %v614 = vpop.f32.mrb[0].mxu0
      %v615 = vpop.f32.mrb[0].mxu0
      %v616 = vadd.f32 %v339, %v615
      %v617 = vpop.f32.mrb[0].mxu0
      %618 = vmatprep.mubr.bf16.mxu0 0
      %619 = vmatmul.mubr.bf16.gmra.mrb[0].mxu0 %v490
      %v620 = vpop.f32.mrb[0].mxu0
      %v621 = vadd.f32 %v339, %v620
      %v622 = vpop.f32.mrb[0].mxu0
      %v623 = vpop.f32.mrb[0].mxu0
      %v624 = vadd.f32 %v339, %v623
      %v625 = vpop.f32.mrb[0].mxu0
      %626 = vmatprep.mubr.bf16.mxu0 0
      %627 = vmatmul.mubr.bf16.gmra.mrb[0].mxu0 %v493
      %v628 = vpop.f32.mrb[0].mxu0
      %v629 = vadd.f32 %v339, %v628
      %v630 = vpop.f32.mrb[0].mxu0
      %v631 = vpop.f32.mrb[0].mxu0
      %v632 = vadd.f32 %v339, %v631
      %v633 = vpop.f32.mrb[0].mxu0
      %634 = vmatprep.mubr.bf16.mxu0 0
      %635 = vmatmul.mubr.bf16.gmra.mrb[0].mxu0 %v496
      %v636 = vpop.f32.mrb[0].mxu0
      %v637 = vadd.f32 %v339, %v636
      %v638 = vpop.f32.mrb[0].mxu0
      %v639 = vpop.f32.mrb[0].mxu0
      %v640 = vadd.f32 %v339, %v639
      %v641 = vpop.f32.mrb[0].mxu0
      %642 = vmatprep.mubr.bf16.mxu0 0
      %643 = vmatmul.mubr.bf16.gmra.mrb[0].mxu0 %v499
      %v644 = vpop.f32.mrb[0].mxu0
      %v645 = vadd.f32 %v339, %v644
      %v646 = vpop.f32.mrb[0].mxu0
      %v647 = vpop.f32.mrb[0].mxu0
      %v648 = vadd.f32 %v339, %v647
      %v649 = vpop.f32.mrb[0].mxu0
      %650 = vmatprep.mubr.bf16.mxu0 0
      %651 = vmatmul.mubr.bf16.gmra.mrb[0].mxu0 %v502
      %v652 = vpop.f32.mrb[0].mxu0
      %v653 = vadd.f32 %v339, %v652
      %v654 = vpop.f32.mrb[0].mxu0
      %v655 = vpop.f32.mrb[0].mxu0
      %v656 = vadd.f32 %v339, %v655
      %v657 = vpop.f32.mrb[0].mxu0
      %658 = vmatprep.mubr.bf16.mxu0 0
      %659 = vmatmul.mubr.bf16.gmra.mrb[0].mxu0 %v505
      %v660 = vpop.f32.mrb[0].mxu0
      %v661 = vadd.f32 %v339, %v660
      %v662 = vpop.f32.mrb[0].mxu0
      %v663 = vpop.f32.mrb[0].mxu0
      %v664 = vadd.f32 %v339, %v663
      %v665 = vpop.f32.mrb[0].mxu0
      %666 = vmatprep.mubr.bf16.mxu0 0
      %667 = vmatmul.mubr.bf16.gmra.mrb[0].mxu0 %v508
      %v668 = vpop.f32.mrb[0].mxu0
      %v669 = vadd.f32 %v339, %v668
      %v670 = vpop.f32.mrb[0].mxu0
      %v671 = vpop.f32.mrb[0].mxu0
      %v672 = vadd.f32 %v339, %v671
      %v673 = vpop.f32.mrb[0].mxu0
      %674 = vmatprep.mubr.bf16.mxu0 0
      %675 = vmatmul.mubr.bf16.gmra.mrb[0].mxu0 %v511
      %v676 = vpop.f32.mrb[0].mxu0
      %v677 = vadd.f32 %v339, %v676
      %v678 = vpop.f32.mrb[0].mxu0
      %v679 = vpop.f32.mrb[0].mxu0
      %v680 = vadd.f32 %v339, %v679
      %v681 = vpop.f32.mrb[0].mxu0
      %682 = vmatprep.mubr.bf16.mxu0 0
      %683 = vmatmul.mubr.bf16.gmra.mrb[0].mxu0 %v514
      %v684 = vpop.f32.mrb[0].mxu0
      %v685 = vadd.f32 %v339, %v684
      %v686 = vpop.f32.mrb[0].mxu0
      %v687 = vpop.f32.mrb[0].mxu0
      %v688 = vadd.f32 %v339, %v687
      %v689 = vpop.f32.mrb[0].mxu0
      %690 = vmatprep.mubr.bf16.mxu0 0
      %691 = vmatmul.mubr.bf16.gmra.mrb[0].mxu0 %v517
      %v692 = vpop.f32.mrb[0].mxu0
      %v693 = vadd.f32 %v339, %v692
      %v694 = vpop.f32.mrb[0].mxu0
      %v695 = vpop.f32.mrb[0].mxu0
      %v696 = vadd.f32 %v339, %v695
      %v697 = vpop.f32.mrb[0].mxu0
      %698 = vmatprep.mubr.bf16.mxu0 0
      %699 = vmatmul.mubr.bf16.gmra.mrb[0].mxu0 %v520
      %v700 = vpop.f32.mrb[0].mxu0
      %v701 = vadd.f32 %v339, %v700
      %v702 = vpop.f32.mrb[0].mxu0
      %v703 = vpop.f32.mrb[0].mxu0
      %v704 = vadd.f32 %v339, %v703
      %v705 = vpop.f32.mrb[0].mxu0
      %706 = vmatprep.mubr.bf16.mxu0 0
      %707 = vmatmul.mubr.bf16.gmra.mrb[0].mxu0 %v523
      %v708 = vpop.f32.mrb[0].mxu0
      %v709 = vadd.f32 %v339, %v708
      %v710 = vpop.f32.mrb[0].mxu0
      %v711 = vpop.f32.mrb[0].mxu0
      %v712 = vadd.f32 %v339, %v711
      %v713 = vpop.f32.mrb[0].mxu0
      %714 = vmatprep.mubr.bf16.mxu0 0
      %715 = vmatmul.mubr.bf16.gmra.mrb[0].mxu0 %v526
      %v716 = vpop.f32.mrb[0].mxu0
      %v717 = vadd.f32 %v339, %v716
      %v718 = vpop.f32.mrb[0].mxu0
      %v719 = vpop.f32.mrb[0].mxu0
      %v720 = vadd.f32 %v339, %v719
      %v721 = vpop.f32.mrb[0].mxu0
      %722 = vmatprep.mubr.bf16.mxu0 0
      %723 = vmatmul.mubr.bf16.gmra.mrb[0].mxu0 %v529
      %v724 = vpop.f32.mrb[0].mxu0
      %v725 = vadd.f32 %v339, %v724
      %v726 = vpop.f32.mrb[0].mxu0
      %v727 = vpop.f32.mrb[0].mxu0
      %v728 = vadd.f32 %v339, %v727
      %v729 = vpop.f32.mrb[0].mxu0
      %730 = vmatprep.mubr.bf16.mxu0 0
      %731 = vmatmul.mubr.bf16.gmra.mrb[0].mxu0 %v532
      %v732 = vpop.f32.mrb[0].mxu0
      %v733 = vadd.f32 %v339, %v732
      %v734 = vpop.f32.mrb[0].mxu0
      %v735 = vpop.f32.mrb[0].mxu0
      %v736 = vadd.f32 %v339, %v735
      %v737 = vpop.f32.mrb[0].mxu0
      %738 = vmatprep.mubr.bf16.mxu0 0
      %739 = vmatmul.mubr.bf16.gmra.mrb[0].mxu0 %v535
      %v740 = vpop.f32.mrb[0].mxu0
      %v741 = vadd.f32 %v339, %v740
      %v742 = vpop.f32.mrb[0].mxu0
      %v743 = vpop.f32.mrb[0].mxu0
      %v744 = vadd.f32 %v339, %v743
      %v745 = vpop.f32.mrb[0].mxu0
      %746 = vmatprep.mubr.bf16.mxu0 0
      %747 = vmatmul.mubr.bf16.gmra.mrb[0].mxu0 %v538
      %v748 = vpop.f32.mrb[0].mxu0
      %v749 = vadd.f32 %v339, %v748
      %v750 = vpop.f32.mrb[0].mxu0
      %v751 = vpop.f32.mrb[0].mxu0
      %v752 = vadd.f32 %v339, %v751
      %v753 = vpop.f32.mrb[0].mxu0
      %754 = vmatprep.mubr.bf16.mxu0 0
      %755 = vmatmul.mubr.bf16.gmra.mrb[0].mxu0 %v541
      %v756 = vpop.f32.mrb[0].mxu0
      %v757 = vadd.f32 %v339, %v756
      %v758 = vpop.f32.mrb[0].mxu0
      %v759 = vpop.f32.mrb[0].mxu0
      %v760 = vadd.f32 %v339, %v759
      %v761 = vpop.f32.mrb[0].mxu0
      %762 = vmatprep.mubr.bf16.mxu0 0
      %763 = vmatmul.mubr.bf16.gmra.mrb[0].mxu0 %v544
      %v764 = vpop.f32.mrb[0].mxu0
      %v765 = vadd.f32 %v339, %v764
      %v766 = vpop.f32.mrb[0].mxu0
      %v767 = vpop.f32.mrb[0].mxu0
      %v768 = vadd.f32 %v339, %v767
      %v769 = vpop.f32.mrb[0].mxu0
      %770 = vdwg.mxu0
      %v771 = vmax.f32 %v581, 0.0
      %v772 = vmax.f32 %v584, 0.0
      %v773 = vmax.f32 %v589, 0.0
      %v774 = vmax.f32 %v592, 0.0
      %v775 = vmax.f32 %v597, 0.0
      %v776 = vmax.f32 %v600, 0.0
      %v777 = vmax.f32 %v605, 0.0
      %v778 = vmax.f32 %v608, 0.0
      %v779 = vmax.f32 %v613, 0.0
      %v780 = vmax.f32 %v616, 0.0
      %v781 = vmax.f32 %v621, 0.0
      %v782 = vmax.f32 %v624, 0.0
      %v783 = vmax.f32 %v629, 0.0
      %v784 = vmax.f32 %v632, 0.0
      %v785 = vmax.f32 %v637, 0.0
      %v786 = vmax.f32 %v640, 0.0
      %v787 = vmax.f32 %v645, 0.0
      %v788 = vmax.f32 %v648, 0.0
      %v789 = vmax.f32 %v653, 0.0
      %v790 = vmax.f32 %v656, 0.0
      %v791 = vmax.f32 %v661, 0.0
      %v792 = vmax.f32 %v664, 0.0
      %v793 = vmax.f32 %v669, 0.0
      %v794 = vmax.f32 %v672, 0.0
      %v795 = vmax.f32 %v677, 0.0
      %v796 = vmax.f32 %v680, 0.0
      %v797 = vmax.f32 %v685, 0.0
      %v798 = vmax.f32 %v688, 0.0
      %v799 = vmax.f32 %v693, 0.0
      %v800 = vmax.f32 %v696, 0.0
      %v801 = vmax.f32 %v701, 0.0
      %v802 = vmax.f32 %v704, 0.0
      %v803 = vmax.f32 %v709, 0.0
      %v804 = vmax.f32 %v712, 0.0
      %v805 = vmax.f32 %v717, 0.0
      %v806 = vmax.f32 %v720, 0.0
      %v807 = vmax.f32 %v725, 0.0
      %v808 = vmax.f32 %v728, 0.0
      %v809 = vmax.f32 %v733, 0.0
      %v810 = vmax.f32 %v736, 0.0
      %v811 = vmax.f32 %v741, 0.0
      %v812 = vmax.f32 %v744, 0.0
      %v813 = vmax.f32 %v749, 0.0
      %v814 = vmax.f32 %v752, 0.0
      %v815 = vmax.f32 %v757, 0.0
      %v816 = vmax.f32 %v760, 0.0
      %v817 = vmax.f32 %v765, 0.0
      %v818 = vmax.f32 %v768, 0.0
      %v819 = vpack.c.bf16 %v772, %v771
      %v820 = vpack.c.bf16 %v774, %v773
      %v821 = vpack.c.bf16 %v776, %v775
      %v822 = vpack.c.bf16 %v778, %v777
      %v823 = vpack.c.bf16 %v780, %v779
      %v824 = vpack.c.bf16 %v782, %v781
      %v825 = vpack.c.bf16 %v784, %v783
      %v826 = vpack.c.bf16 %v786, %v785
      %v827 = vpack.c.bf16 %v788, %v787
      %v828 = vpack.c.bf16 %v790, %v789
      %v829 = vpack.c.bf16 %v792, %v791
      %v830 = vpack.c.bf16 %v794, %v793
      %v831 = vpack.c.bf16 %v796, %v795
      %v832 = vpack.c.bf16 %v798, %v797
      %v833 = vpack.c.bf16 %v800, %v799
      %v834 = vpack.c.bf16 %v802, %v801
      %v835 = vpack.c.bf16 %v804, %v803
      %v836 = vpack.c.bf16 %v806, %v805
      %v837 = vpack.c.bf16 %v808, %v807
      %v838 = vpack.c.bf16 %v810, %v809
      %v839 = vpack.c.bf16 %v812, %v811
      %v840 = vpack.c.bf16 %v814, %v813
      %v841 = vpack.c.bf16 %v816, %v815
      %v842 = vpack.c.bf16 %v818, %v817
      %v843 = vld [vmem:[%s3] sm:$0xf]
      %v844 = vld [vmem:[%s3 + $0x4] sm:$0xf]
      %v845 = vld [vmem:[%s3 + $0x8] sm:$0xf]
      %v846 = vld [vmem:[%s3 + $0xc] sm:$0xf]
      %v847 = vld [vmem:[%s3 + $0x10] sm:$0xf]
      %v848 = vld [vmem:[%s3 + $0x14] sm:$0xf]
      %v849 = vld [vmem:[%s3 + $0x18] sm:$0xf]
      %v850 = vld [vmem:[%s3 + $0x1c] sm:$0xf]
      %v851 = vld [vmem:[%s3 + $0x20] sm:$0xf]
      %v852 = vld [vmem:[%s3 + $0x24] sm:$0xf]
      %v853 = vld [vmem:[%s3 + $0x28] sm:$0xf]
      %v854 = vld [vmem:[%s3 + $0x2c] sm:$0xf]
      %v855 = vld [vmem:[%s3 + $0x30] sm:$0xf]
      %v856 = vld [vmem:[%s3 + $0x34] sm:$0xf]
      %v857 = vld [vmem:[%s3 + $0x38] sm:$0xf]
      %v858 = vld [vmem:[%s3 + $0x3c] sm:$0xf]
      %v859 = vld [vmem:[%s4] sm:$0x1]
      %v861 = vlaneseq
      %v862 = vshrl.u32 %v861, 7
      %v863 = vsub.s32 0, %v862
      %v864 = vrot.slane %v859, %v863
      %v882 = vunpack.c.l.b16 %v843
      %v883 = vunpack.c.l.b16 %v844
      %v884 = vunpack.c.l.b16 %v845
      %v885 = vunpack.c.l.b16 %v846
      %v886 = vunpack.c.l.b16 %v847
      %v887 = vunpack.c.l.b16 %v848
      %v888 = vunpack.c.l.b16 %v849
      %v889 = vunpack.c.l.b16 %v850
      %v890 = vunpack.c.l.b16 %v851
      %v891 = vunpack.c.l.b16 %v852
      %v892 = vunpack.c.l.b16 %v853
      %v893 = vunpack.c.l.b16 %v854
      %v894 = vunpack.c.l.b16 %v855
      %v895 = vunpack.c.l.b16 %v856
      %v896 = vunpack.c.l.b16 %v857
      %v897 = vunpack.c.l.b16 %v858
      %v898 = vpack.c.b16 %v883, %v882
      %v899 = vpack.c.b16 %v885, %v884
      %v900 = vpack.c.b16 %v887, %v886
      %v901 = vpack.c.b16 %v889, %v888
      %v902 = vpack.c.b16 %v891, %v890
      %v903 = vpack.c.b16 %v893, %v892
      %v904 = vpack.c.b16 %v895, %v894
      %v905 = vpack.c.b16 %v897, %v896
      %914 = vmatprep.subr.bf16.mxu0 0
      %915 = vmatpush1.bf16.msra.mxu0 %v898
      %916 = vmatprep.subr.bf16.mxu0 0
      %917 = vmatpush1.bf16.msra.mxu0 %v899
      %918 = vmatprep.subr.bf16.mxu0 0
      %919 = vmatpush1.bf16.msra.mxu0 %v900
      %920 = vmatprep.subr.bf16.mxu0 0
      %921 = vmatpush1.bf16.msra.mxu0 %v901
      %922 = vmatprep.subr.bf16.mxu0 0
      %923 = vmatpush1.bf16.msra.mxu0 %v902
      %924 = vmatprep.subr.bf16.mxu0 0
      %925 = vmatpush1.bf16.msra.mxu0 %v903
      %926 = vmatprep.subr.bf16.mxu0 0
      %927 = vmatpush1.bf16.msra.mxu0 %v904
      %928 = vmatprep.subr.bf16.mxu0 0
      %929 = vmatpush1.bf16.msra.mxu0 %v905
      %930 = vmatprep.subr.bf16.mxu0 0
      %931 = vmatpush1.bf16.msra.mxu0 0
      %932 = vmatprep.subr.bf16.mxu0 0
      %933 = vmatpush1.bf16.msra.mxu0 0
      %934 = vmatprep.subr.bf16.mxu0 0
      %935 = vmatpush1.bf16.msra.mxu0 0
      %936 = vmatprep.subr.bf16.mxu0 0
      %937 = vmatpush1.bf16.msra.mxu0 0
      %938 = vmatprep.subr.bf16.mxu0 0
      %939 = vmatpush1.bf16.msra.mxu0 0
      %940 = vmatprep.subr.bf16.mxu0 0
      %941 = vmatpush1.bf16.msra.mxu0 0
      %942 = vmatprep.subr.bf16.mxu0 0
      %943 = vmatpush1.bf16.msra.mxu0 0
      %944 = vmatprep.subr.bf16.mxu0 0
      %945 = vmatpush1.bf16.msra.mxu0 0
      %946 = vmatprep.mubr.bf16.mxu0 0
      %947 = vmatmul.mubr.bf16.gmra.mrb[0].mxu0 %v819
      %v948 = vpop.f32.mrb[0].mxu0
      %v949 = vadd.f32 %v864, %v948
      %v950 = vpop.f32.mrb[0].mxu0
      %v951 = vpop.f32.mrb[0].mxu0
      %v952 = vadd.f32 %v864, %v951
      %v953 = vpop.f32.mrb[0].mxu0
      %954 = vmatprep.mubr.bf16.mxu0 0
      %955 = vmatmul.mubr.bf16.gmra.mrb[0].mxu0 %v820
      %v956 = vpop.f32.mrb[0].mxu0
      %v957 = vadd.f32 %v864, %v956
      %v958 = vpop.f32.mrb[0].mxu0
      %v959 = vpop.f32.mrb[0].mxu0
      %v960 = vadd.f32 %v864, %v959
      %v961 = vpop.f32.mrb[0].mxu0
      %962 = vmatprep.mubr.bf16.mxu0 0
      %963 = vmatmul.mubr.bf16.gmra.mrb[0].mxu0 %v821
      %v964 = vpop.f32.mrb[0].mxu0
      %v965 = vadd.f32 %v864, %v964
      %v966 = vpop.f32.mrb[0].mxu0
      %v967 = vpop.f32.mrb[0].mxu0
      %v968 = vadd.f32 %v864, %v967
      %v969 = vpop.f32.mrb[0].mxu0
      %970 = vmatprep.mubr.bf16.mxu0 0
      %971 = vmatmul.mubr.bf16.gmra.mrb[0].mxu0 %v822
      %v972 = vpop.f32.mrb[0].mxu0
      %v973 = vadd.f32 %v864, %v972
      %v974 = vpop.f32.mrb[0].mxu0
      %v975 = vpop.f32.mrb[0].mxu0
      %v976 = vadd.f32 %v864, %v975
      %v977 = vpop.f32.mrb[0].mxu0
      %978 = vmatprep.mubr.bf16.mxu0 0
      %979 = vmatmul.mubr.bf16.gmra.mrb[0].mxu0 %v823
      %v980 = vpop.f32.mrb[0].mxu0
      %v981 = vadd.f32 %v864, %v980
      %v982 = vpop.f32.mrb[0].mxu0
      %v983 = vpop.f32.mrb[0].mxu0
      %v984 = vadd.f32 %v864, %v983
      %v985 = vpop.f32.mrb[0].mxu0
      %986 = vmatprep.mubr.bf16.mxu0 0
      %987 = vmatmul.mubr.bf16.gmra.mrb[0].mxu0 %v824
      %v988 = vpop.f32.mrb[0].mxu0
      %v989 = vadd.f32 %v864, %v988
      %v990 = vpop.f32.mrb[0].mxu0
      %v991 = vpop.f32.mrb[0].mxu0
      %v992 = vadd.f32 %v864, %v991
      %v993 = vpop.f32.mrb[0].mxu0
      %994 = vmatprep.mubr.bf16.mxu0 0
      %995 = vmatmul.mubr.bf16.gmra.mrb[0].mxu0 %v825
      %v996 = vpop.f32.mrb[0].mxu0
      %v997 = vadd.f32 %v864, %v996
      %v998 = vpop.f32.mrb[0].mxu0
      %v999 = vpop.f32.mrb[0].mxu0
      %v1000 = vadd.f32 %v864, %v999
      %v1001 = vpop.f32.mrb[0].mxu0
      %1002 = vmatprep.mubr.bf16.mxu0 0
      %1003 = vmatmul.mubr.bf16.gmra.mrb[0].mxu0 %v826
      %v1004 = vpop.f32.mrb[0].mxu0
      %v1005 = vadd.f32 %v864, %v1004
      %v1006 = vpop.f32.mrb[0].mxu0
      %v1007 = vpop.f32.mrb[0].mxu0
      %v1008 = vadd.f32 %v864, %v1007
      %v1009 = vpop.f32.mrb[0].mxu0
      %1010 = vmatprep.mubr.bf16.mxu0 0
      %1011 = vmatmul.mubr.bf16.gmra.mrb[0].mxu0 %v827
      %v1012 = vpop.f32.mrb[0].mxu0
      %v1013 = vadd.f32 %v864, %v1012
      %v1014 = vpop.f32.mrb[0].mxu0
      %v1015 = vpop.f32.mrb[0].mxu0
      %v1016 = vadd.f32 %v864, %v1015
      %v1017 = vpop.f32.mrb[0].mxu0
      %1018 = vmatprep.mubr.bf16.mxu0 0
      %1019 = vmatmul.mubr.bf16.gmra.mrb[0].mxu0 %v828
      %v1020 = vpop.f32.mrb[0].mxu0
      %v1021 = vadd.f32 %v864, %v1020
      %v1022 = vpop.f32.mrb[0].mxu0
      %v1023 = vpop.f32.mrb[0].mxu0
      %v1024 = vadd.f32 %v864, %v1023
      %v1025 = vpop.f32.mrb[0].mxu0
      %1026 = vmatprep.mubr.bf16.mxu0 0
      %1027 = vmatmul.mubr.bf16.gmra.mrb[0].mxu0 %v829
      %v1028 = vpop.f32.mrb[0].mxu0
      %v1029 = vadd.f32 %v864, %v1028
      %v1030 = vpop.f32.mrb[0].mxu0
      %v1031 = vpop.f32.mrb[0].mxu0
      %v1032 = vadd.f32 %v864, %v1031
      %v1033 = vpop.f32.mrb[0].mxu0
      %1034 = vmatprep.mubr.bf16.mxu0 0
      %1035 = vmatmul.mubr.bf16.gmra.mrb[0].mxu0 %v830
      %v1036 = vpop.f32.mrb[0].mxu0
      %v1037 = vadd.f32 %v864, %v1036
      %v1038 = vpop.f32.mrb[0].mxu0
      %v1039 = vpop.f32.mrb[0].mxu0
      %v1040 = vadd.f32 %v864, %v1039
      %v1041 = vpop.f32.mrb[0].mxu0
      %1042 = vmatprep.mubr.bf16.mxu0 0
      %1043 = vmatmul.mubr.bf16.gmra.mrb[0].mxu0 %v831
      %v1044 = vpop.f32.mrb[0].mxu0
      %v1045 = vadd.f32 %v864, %v1044
      %v1046 = vpop.f32.mrb[0].mxu0
      %v1047 = vpop.f32.mrb[0].mxu0
      %v1048 = vadd.f32 %v864, %v1047
      %v1049 = vpop.f32.mrb[0].mxu0
      %1050 = vmatprep.mubr.bf16.mxu0 0
      %1051 = vmatmul.mubr.bf16.gmra.mrb[0].mxu0 %v832
      %v1052 = vpop.f32.mrb[0].mxu0
      %v1053 = vadd.f32 %v864, %v1052
      %v1054 = vpop.f32.mrb[0].mxu0
      %v1055 = vpop.f32.mrb[0].mxu0
      %v1056 = vadd.f32 %v864, %v1055
      %v1057 = vpop.f32.mrb[0].mxu0
      %1058 = vmatprep.mubr.bf16.mxu0 0
      %1059 = vmatmul.mubr.bf16.gmra.mrb[0].mxu0 %v833
      %v1060 = vpop.f32.mrb[0].mxu0
      %v1061 = vadd.f32 %v864, %v1060
      %v1062 = vpop.f32.mrb[0].mxu0
      %v1063 = vpop.f32.mrb[0].mxu0
      %v1064 = vadd.f32 %v864, %v1063
      %v1065 = vpop.f32.mrb[0].mxu0
      %1066 = vmatprep.mubr.bf16.mxu0 0
      %1067 = vmatmul.mubr.bf16.gmra.mrb[0].mxu0 %v834
      %v1068 = vpop.f32.mrb[0].mxu0
      %v1069 = vadd.f32 %v864, %v1068
      %v1070 = vpop.f32.mrb[0].mxu0
      %v1071 = vpop.f32.mrb[0].mxu0
      %v1072 = vadd.f32 %v864, %v1071
      %v1073 = vpop.f32.mrb[0].mxu0
      %1074 = vmatprep.mubr.bf16.mxu0 0
      %1075 = vmatmul.mubr.bf16.gmra.mrb[0].mxu0 %v835
      %v1076 = vpop.f32.mrb[0].mxu0
      %v1077 = vadd.f32 %v864, %v1076
      %v1078 = vpop.f32.mrb[0].mxu0
      %v1079 = vpop.f32.mrb[0].mxu0
      %v1080 = vadd.f32 %v864, %v1079
      %v1081 = vpop.f32.mrb[0].mxu0
      %1082 = vmatprep.mubr.bf16.mxu0 0
      %1083 = vmatmul.mubr.bf16.gmra.mrb[0].mxu0 %v836
      %v1084 = vpop.f32.mrb[0].mxu0
      %v1085 = vadd.f32 %v864, %v1084
      %v1086 = vpop.f32.mrb[0].mxu0
      %v1087 = vpop.f32.mrb[0].mxu0
      %v1088 = vadd.f32 %v864, %v1087
      %v1089 = vpop.f32.mrb[0].mxu0
      %1090 = vmatprep.mubr.bf16.mxu0 0
      %1091 = vmatmul.mubr.bf16.gmra.mrb[0].mxu0 %v837
      %v1092 = vpop.f32.mrb[0].mxu0
      %v1093 = vadd.f32 %v864, %v1092
      %v1094 = vpop.f32.mrb[0].mxu0
      %v1095 = vpop.f32.mrb[0].mxu0
      %v1096 = vadd.f32 %v864, %v1095
      %v1097 = vpop.f32.mrb[0].mxu0
      %1098 = vmatprep.mubr.bf16.mxu0 0
      %1099 = vmatmul.mubr.bf16.gmra.mrb[0].mxu0 %v838
      %v1100 = vpop.f32.mrb[0].mxu0
      %v1101 = vadd.f32 %v864, %v1100
      %v1102 = vpop.f32.mrb[0].mxu0
      %v1103 = vpop.f32.mrb[0].mxu0
      %v1104 = vadd.f32 %v864, %v1103
      %v1105 = vpop.f32.mrb[0].mxu0
      %1106 = vmatprep.mubr.bf16.mxu0 0
      %1107 = vmatmul.mubr.bf16.gmra.mrb[0].mxu0 %v839
      %v1108 = vpop.f32.mrb[0].mxu0
      %v1109 = vadd.f32 %v864, %v1108
      %v1110 = vpop.f32.mrb[0].mxu0
      %v1111 = vpop.f32.mrb[0].mxu0
      %v1112 = vadd.f32 %v864, %v1111
      %v1113 = vpop.f32.mrb[0].mxu0
      %1114 = vmatprep.mubr.bf16.mxu0 0
      %1115 = vmatmul.mubr.bf16.gmra.mrb[0].mxu0 %v840
      %v1116 = vpop.f32.mrb[0].mxu0
      %v1117 = vadd.f32 %v864, %v1116
      %v1118 = vpop.f32.mrb[0].mxu0
      %v1119 = vpop.f32.mrb[0].mxu0
      %v1120 = vadd.f32 %v864, %v1119
      %v1121 = vpop.f32.mrb[0].mxu0
      %1122 = vmatprep.mubr.bf16.mxu0 0
      %1123 = vmatmul.mubr.bf16.gmra.mrb[0].mxu0 %v841
      %v1124 = vpop.f32.mrb[0].mxu0
      %v1125 = vadd.f32 %v864, %v1124
      %v1126 = vpop.f32.mrb[0].mxu0
      %v1127 = vpop.f32.mrb[0].mxu0
      %v1128 = vadd.f32 %v864, %v1127
      %v1129 = vpop.f32.mrb[0].mxu0
      %1130 = vmatprep.mubr.bf16.mxu0 0
      %1131 = vmatmul.mubr.bf16.gmra.mrb[0].mxu0 %v842
      %v1132 = vpop.f32.mrb[0].mxu0
      %v1133 = vadd.f32 %v864, %v1132
      %v1134 = vpop.f32.mrb[0].mxu0
      %v1135 = vpop.f32.mrb[0].mxu0
      %v1136 = vadd.f32 %v864, %v1135
      %v1137 = vpop.f32.mrb[0].mxu0
      %1138 = vdwg.mxu0
      %v1139 = vmax.f32 %v949, 0.0
      %v1140 = vmax.f32 %v952, 0.0
      %v1141 = vmax.f32 %v957, 0.0
      %v1142 = vmax.f32 %v960, 0.0
      %v1143 = vmax.f32 %v965, 0.0
      %v1144 = vmax.f32 %v968, 0.0
      %v1145 = vmax.f32 %v973, 0.0
      %v1146 = vmax.f32 %v976, 0.0
      %v1147 = vmax.f32 %v981, 0.0
      %v1148 = vmax.f32 %v984, 0.0
      %v1149 = vmax.f32 %v989, 0.0
      %v1150 = vmax.f32 %v992, 0.0
      %v1151 = vmax.f32 %v997, 0.0
      %v1152 = vmax.f32 %v1000, 0.0
      %v1153 = vmax.f32 %v1005, 0.0
      %v1154 = vmax.f32 %v1008, 0.0
      %v1155 = vmax.f32 %v1013, 0.0
      %v1156 = vmax.f32 %v1016, 0.0
      %v1157 = vmax.f32 %v1021, 0.0
      %v1158 = vmax.f32 %v1024, 0.0
      %v1159 = vmax.f32 %v1029, 0.0
      %v1160 = vmax.f32 %v1032, 0.0
      %v1161 = vmax.f32 %v1037, 0.0
      %v1162 = vmax.f32 %v1040, 0.0
      %v1163 = vmax.f32 %v1045, 0.0
      %v1164 = vmax.f32 %v1048, 0.0
      %v1165 = vmax.f32 %v1053, 0.0
      %v1166 = vmax.f32 %v1056, 0.0
      %v1167 = vmax.f32 %v1061, 0.0
      %v1168 = vmax.f32 %v1064, 0.0
      %v1169 = vmax.f32 %v1069, 0.0
      %v1170 = vmax.f32 %v1072, 0.0
      %v1171 = vmax.f32 %v1077, 0.0
      %v1172 = vmax.f32 %v1080, 0.0
      %v1173 = vmax.f32 %v1085, 0.0
      %v1174 = vmax.f32 %v1088, 0.0
      %v1175 = vmax.f32 %v1093, 0.0
      %v1176 = vmax.f32 %v1096, 0.0
      %v1177 = vmax.f32 %v1101, 0.0
      %v1178 = vmax.f32 %v1104, 0.0
      %v1179 = vmax.f32 %v1109, 0.0
      %v1180 = vmax.f32 %v1112, 0.0
      %v1181 = vmax.f32 %v1117, 0.0
      %v1182 = vmax.f32 %v1120, 0.0
      %v1183 = vmax.f32 %v1125, 0.0
      %v1184 = vmax.f32 %v1128, 0.0
      %v1185 = vmax.f32 %v1133, 0.0
      %v1186 = vmax.f32 %v1136, 0.0
      %v1187 = vld [vmem:[%s5] sm:$0x1]
      %v1188 = vpack.c.bf16 %v1140, %v1139
      %v1189 = vpack.c.bf16 %v1142, %v1141
      %v1190 = vpack.c.bf16 %v1144, %v1143
      %v1191 = vpack.c.bf16 %v1146, %v1145
      %v1192 = vpack.c.bf16 %v1148, %v1147
      %v1193 = vpack.c.bf16 %v1150, %v1149
      %v1194 = vpack.c.bf16 %v1152, %v1151
      %v1195 = vpack.c.bf16 %v1154, %v1153
      %v1196 = vpack.c.bf16 %v1156, %v1155
      %v1197 = vpack.c.bf16 %v1158, %v1157
      %v1198 = vpack.c.bf16 %v1160, %v1159
      %v1199 = vpack.c.bf16 %v1162, %v1161
      %v1200 = vpack.c.bf16 %v1164, %v1163
      %v1201 = vpack.c.bf16 %v1166, %v1165
      %v1202 = vpack.c.bf16 %v1168, %v1167
      %v1203 = vpack.c.bf16 %v1170, %v1169
      %v1204 = vpack.c.bf16 %v1172, %v1171
      %v1205 = vpack.c.bf16 %v1174, %v1173
      %v1206 = vpack.c.bf16 %v1176, %v1175
      %v1207 = vpack.c.bf16 %v1178, %v1177
      %v1208 = vpack.c.bf16 %v1180, %v1179
      %v1209 = vpack.c.bf16 %v1182, %v1181
      %v1210 = vpack.c.bf16 %v1184, %v1183
      %v1211 = vpack.c.bf16 %v1186, %v1185
      %s1212 = sld [smem:[#allocation2]]
      %v1213 = vstv %s1212
      %vm1214 = vcmask 523264
      %v1216 = vsel %vm1214, %v1187, 0
      %v1219 = vsel %vm1214, %v1188, 0
      %v1222 = vsel %vm1214, %v1189, 0
      %v1225 = vsel %vm1214, %v1190, 0
      %v1228 = vsel %vm1214, %v1191, 0
      %v1231 = vsel %vm1214, %v1192, 0
      %v1234 = vsel %vm1214, %v1193, 0
      %v1237 = vsel %vm1214, %v1194, 0
      %v1240 = vsel %vm1214, %v1195, 0
      %v1243 = vsel %vm1214, %v1196, 0
      %v1246 = vsel %vm1214, %v1197, 0
      %v1249 = vsel %vm1214, %v1198, 0
      %v1252 = vsel %vm1214, %v1199, 0
      %v1255 = vsel %vm1214, %v1200, 0
      %v1258 = vsel %vm1214, %v1201, 0
      %v1261 = vsel %vm1214, %v1202, 0
      %v1264 = vsel %vm1214, %v1203, 0
      %v1267 = vsel %vm1214, %v1204, 0
      %v1270 = vsel %vm1214, %v1205, 0
      %v1273 = vsel %vm1214, %v1206, 0
      %v1276 = vsel %vm1214, %v1207, 0
      %v1279 = vsel %vm1214, %v1208, 0
      %v1282 = vsel %vm1214, %v1209, 0
      %v1285 = vsel %vm1214, %v1210, 0
      %v1288 = vsel %vm1214, %v1211, 0
      %1290 = vmatprep.subr.bf16.mxu0 0
      %1291 = vmatpush1.bf16.xpose.msra.mxu0 %v1219
      %1292 = vmatprep.subr.bf16.mxu0 0
      %1293 = vmatpush1.bf16.xpose.msra.mxu0 %v1222
      %1294 = vmatprep.subr.bf16.mxu0 0
      %1295 = vmatpush1.bf16.xpose.msra.mxu0 %v1225
      %1296 = vmatprep.subr.bf16.mxu0 0
      %1297 = vmatpush1.bf16.xpose.msra.mxu0 %v1228
      %1298 = vmatprep.subr.bf16.mxu0 0
      %1299 = vmatpush1.bf16.xpose.msra.mxu0 %v1231
      %1300 = vmatprep.subr.bf16.mxu0 0
      %1301 = vmatpush1.bf16.xpose.msra.mxu0 %v1234
      %1302 = vmatprep.subr.bf16.mxu0 0
      %1303 = vmatpush1.bf16.xpose.msra.mxu0 %v1237
      %1304 = vmatprep.subr.bf16.mxu0 0
      %1305 = vmatpush1.bf16.xpose.msra.mxu0 %v1240
      %1306 = vmatprep.subr.bf16.mxu0 0
      %1307 = vmatpush1.bf16.xpose.msra.mxu0 %v1243
      %1308 = vmatprep.subr.bf16.mxu0 0
      %1309 = vmatpush1.bf16.xpose.msra.mxu0 %v1246
      %1310 = vmatprep.subr.bf16.mxu0 0
      %1311 = vmatpush1.bf16.xpose.msra.mxu0 %v1249
      %1312 = vmatprep.subr.bf16.mxu0 0
      %1313 = vmatpush1.bf16.xpose.msra.mxu0 %v1252
      %1314 = vmatprep.subr.bf16.mxu0 0
      %1315 = vmatpush1.bf16.xpose.msra.mxu0 %v1255
      %1316 = vmatprep.subr.bf16.mxu0 0
      %1317 = vmatpush1.bf16.xpose.msra.mxu0 %v1258
      %1318 = vmatprep.subr.bf16.mxu0 0
      %1319 = vmatpush1.bf16.xpose.msra.mxu0 %v1261
      %1320 = vmatprep.subr.bf16.mxu0 0
      %1321 = vmatpush1.bf16.xpose.msra.mxu0 %v1264
      %1322 = vmatprep.mubr.bf16.mxu0 0
      %1323 = vmatmul.mubr.bf16.gmra.mrb[0].mxu0 %v1216
      %v1324 = vpop.f32.mrb[0].mxu0
      %v1325 = vadd.f32 %v1213, %v1324
      %v1326 = vpop.f32.mrb[0].mxu0
      %v1327 = vadd.f32 %v1213, %v1326
      %v1328 = vpop.f32.mrb[0].mxu0
      %v1329 = vpop.f32.mrb[0].mxu0
      %1330 = vdwg.mxu0
      %1331 = vmatprep.subr.bf16.mxu0 0
      %1332 = vmatpush1.bf16.xpose.msra.mxu0 %v1267
      %1333 = vmatprep.subr.bf16.mxu0 0
      %1334 = vmatpush1.bf16.xpose.msra.mxu0 %v1270
      %1335 = vmatprep.subr.bf16.mxu0 0
      %1336 = vmatpush1.bf16.xpose.msra.mxu0 %v1273
      %1337 = vmatprep.subr.bf16.mxu0 0
      %1338 = vmatpush1.bf16.xpose.msra.mxu0 %v1276
      %1339 = vmatprep.subr.bf16.mxu0 0
      %1340 = vmatpush1.bf16.xpose.msra.mxu0 %v1279
      %1341 = vmatprep.subr.bf16.mxu0 0
      %1342 = vmatpush1.bf16.xpose.msra.mxu0 %v1282
      %1343 = vmatprep.subr.bf16.mxu0 0
      %1344 = vmatpush1.bf16.xpose.msra.mxu0 %v1285
      %1345 = vmatprep.subr.bf16.mxu0 0
      %1346 = vmatpush1.bf16.xpose.msra.mxu0 %v1288
      %1347 = vmatprep.subr.bf16.mxu0 0
      %1348 = vmatpush1.bf16.xpose.msra.mxu0 0
      %1349 = vmatprep.subr.bf16.mxu0 0
      %1350 = vmatpush1.bf16.xpose.msra.mxu0 0
      %1351 = vmatprep.subr.bf16.mxu0 0
      %1352 = vmatpush1.bf16.xpose.msra.mxu0 0
      %1353 = vmatprep.subr.bf16.mxu0 0
      %1354 = vmatpush1.bf16.xpose.msra.mxu0 0
      %1355 = vmatprep.subr.bf16.mxu0 0
      %1356 = vmatpush1.bf16.xpose.msra.mxu0 0
      %1357 = vmatprep.subr.bf16.mxu0 0
      %1358 = vmatpush1.bf16.xpose.msra.mxu0 0
      %1359 = vmatprep.subr.bf16.mxu0 0
      %1360 = vmatpush1.bf16.xpose.msra.mxu0 0
      %1361 = vmatprep.subr.bf16.mxu0 0
      %1362 = vmatpush1.bf16.xpose.msra.mxu0 0
      %1363 = vmatprep.mubr.bf16.mxu0 0
      %1364 = vmatmul.mubr.bf16.gmra.mrb[0].mxu0 %v1216
      %v1365 = vpop.f32.mrb[0].mxu0
      %v1366 = vadd.f32 %v1213, %v1365
      %v1367 = vpop.f32.mrb[0].mxu0
      %v1368 = vpop.f32.mrb[0].mxu0
      %v1369 = vpop.f32.mrb[0].mxu0
      %1370 = vdwg.mxu0
      %v1374 = vcombine.low %v1325, %v1327
      %v1376 = vunpack.c.l.s4 1966171168
      %v1377 = vunpack.c.0.s8 %v1376
      %v1378 = vlaneseq
      %v1379 = vshrl.u32 %v1378, 7
      %v1380 = vsub.s32 %v1377, %v1379
      %v1381 = vrot.slane %v1374, %v1380
      %v1383 = vunpack.c.l.s4 1966171168
      %v1384 = vunpack.c.0.s8 %v1383
      %v1385 = vlaneseq
      %v1386 = vshrl.u32 %v1385, 7
      %v1387 = vsub.s32 %v1384, %v1386
      %v1388 = vrot.slane %v1366, %v1387
      %v1389 = vcombine.low %v1381, %v1388
      %v1391 = vunpack.c.l.s4 1966171168
      %v1392 = vunpack.c.0.s8 %v1391
      %v1393 = vlaneseq
      %v1394 = vshrl.u32 %v1393, 7
      %v1395 = vsub.s32 %v1392, %v1394
      %v1396 = vrot.slane %v1389, %v1395
      %v1398 = vlaneseq
      %vm1399 = vcmp.ge.s32.totalorder %v1398, 0
      %vm1400 = vcmp.lt.s32.totalorder %v1398, 384
      %vm1401 = vmand %vm1399, %vm1400
      %1402 = vst.msk [vmem:[%s279] sm:$0x7] %vm1401, %v1396
      %s1403 = smul.u32 3, %s19
      %p1404 = scmp.lt.s32.totalorder %s1403, 5
      %s1405 = scalar_select %p1404, %s1403, 5
      %s1406 = scalar_lea.vmem %s7, %s1405
      // Predicated region
      $region49: #{ev_sales_forward.1} parent=47 // pred_check
        %p1407 = pneg %p189
      $region50: #{ev_sales_forward.1} parent=47 // pred_check_branch
        %1409 = sbr.rel (%p1407) target = $region52
      $region51: #{ev_sales_forward.1} parent=47 // pred_region
        %s1410 = smul.u32 3, %s19
      $region52: #{ev_sales_forward.1} parent=47 // pred_fallthru
        _
    $region48: #{ev_sales_forward.1} parent=5 // pred_fallthru
      _
    %p1411 = scmp.le.s32.totalorder 2, %s14
    // Predicated region
    $region53: #{ev_sales_forward.1} parent=5 // pred_check
      %p1412 = pneg %p1411
    $region54: #{ev_sales_forward.1} parent=5 // pred_check_branch
      %1414 = sbr.rel (%p1412) target = $region56
    $region55: #{ev_sales_forward.1} parent=5 // pred_region
      %s1415 = ssub.s32 %s14, 2
      // Predicated region
      $region57: #{ev_sales_forward.1} parent=55 // pred_check
        %p1416 = pneg %p195
      $region58: #{ev_sales_forward.1} parent=55 // pred_check_branch
        %1418 = sbr.rel (%p1416) target = $region60
      $region59: #{ev_sales_forward.1} parent=55 // pred_region
        %s1419 = smul.u32 3, %s20
        %p1420 = scmp.lt.s32.totalorder %s1419, 5
        %s1421 = scalar_select %p1420, %s1419, 5
        %s1422 = scalar_lea.vmem %s7, %s1421
      $region60: #{ev_sales_forward.1} parent=55 // pred_fallthru
        _
    $region56: #{ev_sales_forward.1} parent=5 // pred_fallthru
      _
  $region6: #{ev_sales_forward.1} parent=0 // loop_footer
    %s18 = sadd.s32 1, %s14
  $region7: #{ev_sales_forward.1} parent=0 // loop_footer_branch
    %13 = sbr.rel target = $region3
  $region8: #{ev_sales_forward.1} parent=0 // loop_exit
    _

</llo_original>
